<compile_context>
chip_gen: v5e
topology: v5e:2x2
jax: 0.10.0
libtpu: 0.0.40
codegen_flags: <defaults>
</compile_context>

<pallas_src>
import functools

import jax
import jax.numpy as jnp
from jax.experimental import pallas as pl
from jax.experimental.pallas import tpu as pltpu

M_PLUS = 0.9
M_MINUS = 0.1

_LANES = 128
_MAX_TILE_ROWS = 4096                       # 2 MiB f32 per input block
_MIN_PALLAS_ELEMS = _MAX_TILE_ROWS * _LANES  # below ~1 tile, pure JAX wins


def _sublane_multiple(dtype):
    # Native sublane packing: 8 rows (32-bit), 16 (bf16/f16), 32 (int8/fp8).
    itemsize = jnp.dtype(dtype).itemsize
    return max(8, 8 * (4 // max(1, itemsize)))


def _margin_loss_tile_kernel(x_ref, t_ref, out_ref, *, loss_lambda, valid_rows,
                             tile_rows, needs_mask):
    """One (tile_rows, 128) tile -> (8, 128) per-sublane/lane partial sums."""
    x = x_ref[...].astype(jnp.float32)
    t = t_ref[...].astype(jnp.float32)

    # L = T*relu(m+ - x)^2 + lambda*(1-T)*relu(x - m-)^2
    #   = lambda*neg^2 + T*(pos^2 - lambda*neg^2)   (factored: fewer VALU ops)
    pos = jnp.maximum(M_PLUS - x, 0.0)
    neg = jnp.maximum(x - M_MINUS, 0.0)
    lneg2 = loss_lambda * (neg * neg)
    l_k = lneg2 + t * (pos * pos - lneg2)

    def _reduce(v):
        # (tile_rows,128) -> (tile_rows//8, 8, 128) -> (8,128): vreg-aligned sum,
        # stored as a native unmasked (8,128) block.
        return jnp.sum(v.reshape(tile_rows // 8, 8, _LANES), axis=0)

    if needs_mask:
        i = pl.program_id(0)
        is_last = i == pl.num_programs(0) - 1

        @pl.when(is_last)
        def _():
            # Rows beyond `valid_rows` in the last block are OOB garbage -> zero them.
            row_ids = jax.lax.broadcasted_iota(jnp.int32, (tile_rows, _LANES), 0)
            valid = (i * tile_rows + row_ids) < valid_rows
            out_ref[...] = _reduce(jnp.where(valid, l_k, 0.0))

        @pl.when(jnp.logical_not(is_last))
        def _():
            out_ref[...] = _reduce(l_k)
    else:
        out_ref[...] = _reduce(l_k)


def _margin_loss_jax(inputs, labels, loss_lambda=0.5, size_average=False):
    # Pure-JAX reference / small-problem fallback (f32 compute, exact module math).
    inputs = inputs.astype(jnp.float32)
    labels = labels.astype(jnp.float32)
    l_k = labels * jnp.maximum(M_PLUS - inputs, 0.0) ** 2 + \
        loss_lambda * (1.0 - labels) * jnp.maximum(inputs - M_MINUS, 0.0) ** 2
    l_k = l_k.sum(axis=1)
    return l_k.mean() if size_average else l_k.sum()


def margin_loss(inputs, labels, *, loss_lambda=0.5, size_average=False,
                force_pallas=False):
    """Pallas TPU implementation of MarginLoss.forward.

    Args:
      inputs: (B, C) float array of capsule lengths ||v_k||.
      labels: (B, C) float array of (one-hot) targets T_k (any float/int dtype;
        bf16/int8 labels are streamed natively and cast in-kernel).
    Returns:
      scalar float32 loss (sum over batch, or mean if size_average=True).
    """
    assert inputs.shape == labels.shape and inputs.ndim == 2
    B, C = inputs.shape
    n = B * C

    # Sub-tile problems: fixed Pallas launch cost dwarfs the work.
    if n < _MIN_PALLAS_ELEMS and not force_pallas:
        return _margin_loss_jax(inputs, labels, loss_lambda, size_average)

    sub = max(_sublane_multiple(inputs.dtype), _sublane_multiple(labels.dtype))
    rows = pl.cdiv(n, _LANES)
    if rows <= sub:
        rows_arr = sub                                   # tiny: pad to one sublane group
        tile_rows = sub
    else:
        rows_arr = rows                                  # no row padding; mask in-kernel
        tile_rows = min(_MAX_TILE_ROWS, (rows // sub) * sub)
    num_tiles = pl.cdiv(rows_arr, tile_rows)
    needs_mask = (rows_arr % tile_rows) != 0
    n_arr = rows_arr * _LANES

    def _to_lane_dense(a):
        a = a.reshape(-1)                                # contiguous: free
        if n_arr != n:                                   # only if n % 128 != 0 or tiny
            a = jnp.pad(a, (0, n_arr - n))               # zero pad contributes 0 to loss
        return a.reshape(rows_arr, _LANES)

    x2 = _to_lane_dense(inputs)                          # native dtype, no wrapper upcast
    t2 = _to_lane_dense(labels)

    kernel = functools.partial(
        _margin_loss_tile_kernel,
        loss_lambda=float(loss_lambda),
        valid_rows=rows_arr,
        tile_rows=tile_rows,
        needs_mask=needs_mask,
    )

    partials = pl.pallas_call(
        kernel,
        out_shape=jax.ShapeDtypeStruct((num_tiles * 8, _LANES), jnp.float32),
        grid_spec=pltpu.PrefetchScalarGridSpec(
            num_scalar_prefetch=0,
            grid=(num_tiles,),
            in_specs=[
                pl.BlockSpec((tile_rows, _LANES), lambda i: (i, 0)),
                pl.BlockSpec((tile_rows, _LANES), lambda i: (i, 0)),
            ],
            # Each grid step writes its own (8,128) partial block: no serial
            # accumulator, so the grid axis is "parallel" (megacore on v7x).
            out_specs=pl.BlockSpec((8, _LANES), lambda i: (i, 0)),
        ),
        compiler_params=pltpu.CompilerParams(
            dimension_semantics=("parallel",),
        ),
    )(x2, t2)

    # Tiny finish: sum num_tiles*8*128 partials, then optional mean over batch.
    total = jnp.sum(partials)
    if size_average:
        total = total / jnp.float32(B)
    return total


if __name__ == "__main__":
    key = jax.random.PRNGKey(0)
    k1, k2, k3, k4 = jax.random.split(key, 4)

    # Small shapes consistent with the module (capsule lengths, 10 digit classes).
    B, C = 8, 10
    inputs = jax.random.uniform(k1, (B, C), dtype=jnp.float32)
    labels = jax.nn.one_hot(jax.random.randint(k2, (B,), 0, C), C, dtype=jnp.float32)

    # sum reduction (force the Pallas path so the kernel is exercised)
    loss = margin_loss(inputs, labels, loss_lambda=0.5, size_average=False,
                       force_pallas=True)
    jax.block_until_ready(loss)
    ref = _margin_loss_jax(inputs, labels, 0.5, False)
    assert jnp.allclose(loss, ref, rtol=1e-5, atol=1e-5), (loss, ref)

    # mean reduction
    loss_avg = margin_loss(inputs, labels, loss_lambda=0.5, size_average=True,
                           force_pallas=True)
    jax.block_until_ready(loss_avg)
    ref_avg = _margin_loss_jax(inputs, labels, 0.5, True)
    assert jnp.allclose(loss_avg, ref_avg, rtol=1e-5, atol=1e-5), (loss_avg, ref_avg)

    # Narrow-dtype path: bf16 inputs/labels streamed natively, cast in-kernel.
    loss_bf16 = margin_loss(inputs.astype(jnp.bfloat16), labels.astype(jnp.bfloat16),
                            force_pallas=True)
    jax.block_until_ready(loss_bf16)
    ref_bf16 = _margin_loss_jax(inputs.astype(jnp.bfloat16),
                                labels.astype(jnp.bfloat16), 0.5, False)
    assert jnp.allclose(loss_bf16, ref_bf16, rtol=1e-5, atol=1e-5), (loss_bf16, ref_bf16)

    # Default small-problem dispatch (pure-JAX short circuit, no kernel launch).
    loss_sc = margin_loss(inputs, labels, loss_lambda=0.5, size_average=False)
    jax.block_until_ready(loss_sc)
    assert jnp.allclose(loss_sc, ref, rtol=1e-5, atol=1e-5), (loss_sc, ref)

    # Multi-tile shape exercising the partial-last-tile mask with zero padding copy:
    # 8192*130 = 1,064,960 elems -> 8320 rows -> 3 tiles of 4096 (last has 128 valid rows).
    Bb, Cb = 8192, 130
    big_x = jax.random.uniform(k3, (Bb, Cb), dtype=jnp.float32)
    big_t = jax.nn.one_hot(jax.random.randint(k4, (Bb,), 0, Cb), Cb, dtype=jnp.float32)
    big_loss = margin_loss(big_x, big_t, loss_lambda=0.5, size_average=True)
    jax.block_until_ready(big_loss)
    big_ref = _margin_loss_jax(big_x, big_t, 0.5, True)
    assert jnp.allclose(big_loss, big_ref, rtol=1e-3, atol=1e-3), (big_loss, big_ref)

    print("KERNEL_OK")
</pallas_src>

<mosaic_0001>
module attributes {stable_mosaic.version = 11 : i64} {
  func.func @_margin_loss_tile_kernel(%arg0: i32, %arg1: memref<8x128xf32, #tpu.memory_space<vmem>>, %arg2: memref<8x128xf32, #tpu.memory_space<vmem>>, %arg3: memref<8x128xf32, #tpu.memory_space<vmem>>) attributes {dimension_semantics = [#tpu.dimension_semantics<parallel>], iteration_bounds = array<i64: 1>, scalar_prefetch = 0 : i64, scratch_operands = 0 : i64, tpu.core_type = #tpu.core_type<tc>, window_params = [{transform_indices = @transform_0, window_bounds = array<i64: 8, 128>}, {transform_indices = @transform_1, window_bounds = array<i64: 8, 128>}, {transform_indices = @transform_2, window_bounds = array<i64: 8, 128>}]} {
    %c0 = arith.constant 0 : index
    %c0_0 = arith.constant 0 : index
    %0 = vector.load %arg1[%c0, %c0_0] : memref<8x128xf32, #tpu.memory_space<vmem>>, vector<8x128xf32>
    %c0_1 = arith.constant 0 : index
    %c0_2 = arith.constant 0 : index
    %1 = vector.load %arg2[%c0_1, %c0_2] : memref<8x128xf32, #tpu.memory_space<vmem>>, vector<8x128xf32>
    %cst = arith.constant 0.899999976 : f32
    %2 = vector.broadcast %cst : f32 to vector<8x128xf32>
    %3 = arith.subf %2, %0 : vector<8x128xf32>
    %cst_3 = arith.constant 0.000000e+00 : f32
    %4 = vector.broadcast %cst_3 : f32 to vector<8x128xf32>
    %5 = arith.maximumf %3, %4 : vector<8x128xf32>
    %cst_4 = arith.constant 1.000000e-01 : f32
    %6 = vector.broadcast %cst_4 : f32 to vector<8x128xf32>
    %7 = arith.subf %0, %6 : vector<8x128xf32>
    %cst_5 = arith.constant 0.000000e+00 : f32
    %8 = vector.broadcast %cst_5 : f32 to vector<8x128xf32>
    %9 = arith.maximumf %7, %8 : vector<8x128xf32>
    %10 = arith.mulf %9, %9 : vector<8x128xf32>
    %cst_6 = arith.constant 5.000000e-01 : f32
    %11 = vector.broadcast %cst_6 : f32 to vector<8x128xf32>
    %12 = arith.mulf %11, %10 : vector<8x128xf32>
    %13 = arith.mulf %5, %5 : vector<8x128xf32>
    %14 = arith.subf %13, %12 : vector<8x128xf32>
    %15 = arith.mulf %1, %14 : vector<8x128xf32>
    %16 = arith.addf %12, %15 : vector<8x128xf32>
    %17 = vector.shape_cast %16 : vector<8x128xf32> to vector<1x8x128xf32>
    %cst_7 = arith.constant dense<0.000000e+00> : vector<8x128xf32>
    %18 = vector.multi_reduction <add>, %17, %cst_7 [0] : vector<1x8x128xf32> to vector<8x128xf32>
    %c0_8 = arith.constant 0 : index
    %c0_9 = arith.constant 0 : index
    %19 = vector.load %arg3[%c0_8, %c0_9] : memref<8x128xf32, #tpu.memory_space<vmem>>, vector<8x128xf32>
    tpu.vector_store %arg3[%c0_8, %c0_9], %18 {strides = array<i32>} : memref<8x128xf32, #tpu.memory_space<vmem>>, vector<8x128xf32>,
    return
  }
  func.func @transform_0(%arg0: i32) -> (i32, i32) {
    %c0_i32 = arith.constant 0 : i32
    %c0_i32_0 = arith.constant 0 : i32
    return %arg0, %c0_i32 : i32, i32
  }
  func.func @transform_1(%arg0: i32) -> (i32, i32) {
    %c0_i32 = arith.constant 0 : i32
    %c0_i32_0 = arith.constant 0 : i32
    return %arg0, %c0_i32 : i32, i32
  }
  func.func @transform_2(%arg0: i32) -> (i32, i32) {
    %c0_i32 = arith.constant 0 : i32
    %c0_i32_0 = arith.constant 0 : i32
    return %arg0, %c0_i32 : i32, i32
  }
}

</mosaic_0001>

<llo_original>
// kernel: tpu_custom_call.1
$region0: #{tpu_custom_call.1}
  #allocation0 [shape = 'u32[]', space=smem, size = 0x4, offset = 0x4, fixed_abs, tag = 'smem constant byte address 0x4 - core index']
  #allocation1 [shape = 'u32[72,128]{1,0:T(1,128)}', space=vmem, size = 0x9000, scoped, tag = 'internal scratch']
  %s0 = inlined_call_operand.hbm [shape: f32[8,128], index: 0, kind: input, shape index: {}]
  %s1 = inlined_call_operand.hbm [shape: f32[8,128], index: 1, kind: input, shape index: {}]
  %s2 = inlined_call_operand.hbm [shape: f32[8,128], index: 2, kind: output, shape index: {}]
  %s3 = sld [smem:[#allocation0]]
  $region26: #{tpu_custom_call.1} parent=0
    _
  %s5 = ssub.s32 1, %s3
  %s6 = scalar_select 0, %s5, %s3
  $region1: #{tpu_custom_call.1} parent=0
    #allocation2 [shape = 'u8[4096]{0}', space=vmem, size = 0x1000, scoped, tag = 'input window, operand 0, single buffered']
    #allocation3 [shape = 's32[1]{0}', space=sflag, size = 0x4, scoped, tag = 'scoped memory for tpu_custom_call.1']
    #allocation4 [shape = 's32[1]{0}', space=sflag, size = 0x4, scoped, tag = 'scoped memory for tpu_custom_call.1']
    #allocation5 [shape = 'u8[4096]{0}', space=vmem, size = 0x1000, scoped, tag = 'input window, operand 1, single buffered']
    #allocation6 [shape = 's32[1]{0}', space=sflag, size = 0x4, scoped, tag = 'scoped memory for tpu_custom_call.1']
    #allocation7 [shape = 'u8[4096]{0}', space=vmem, size = 0x1000, scoped, tag = 'output window, operand 0, single buffered']
    %7 = vsyncpa [#allocation3], 0
    %8 = vsyncpa [#allocation6], 0
    %9 = vsyncpa [#allocation4], 0
    // Predicated region
    $region2: #{tpu_custom_call.1} parent=1 // pred_check
      _
    $region3: #{tpu_custom_call.1} parent=1 // pred_check_branch
      %11 = sbr.rel (0) target = $region5
    $region4: #{tpu_custom_call.1} parent=1 // pred_region
      %13 = vsyncadd [#allocation3], 0
      %s15 = sshll.u32 %s0, 4
      %s16 = int_to_ptr.hbm [resolvable:$true] %s15
      %s17 = sshll.u32 [#allocation2], 4
      %s18 = int_to_ptr.vmem [resolvable:$true] %s17
      %20 = dma.hbm_to_vmem [thread:$0]  %s16, 128, %s18, [#allocation3]
    $region5: #{tpu_custom_call.1} parent=1 // pred_fallthru
      _
    // Predicated region
    $region6: #{tpu_custom_call.1} parent=1 // pred_check
      _
    $region7: #{tpu_custom_call.1} parent=1 // pred_check_branch
      %22 = sbr.rel (0) target = $region9
    $region8: #{tpu_custom_call.1} parent=1 // pred_region
      %24 = vsyncadd [#allocation6], 0
      %s26 = sshll.u32 %s1, 4
      %s27 = int_to_ptr.hbm [resolvable:$true] %s26
      %s28 = sshll.u32 [#allocation5], 4
      %s29 = int_to_ptr.vmem [resolvable:$true] %s28
      %31 = dma.hbm_to_vmem [thread:$0]  %s27, 128, %s29, [#allocation6]
    $region9: #{tpu_custom_call.1} parent=1 // pred_fallthru
      _
    // Predicated region
    $region10: #{tpu_custom_call.1} parent=1 // pred_check
      _
    $region11: #{tpu_custom_call.1} parent=1 // pred_check_branch
      %33 = sbr.rel (0) target = $region13
    $region12: #{tpu_custom_call.1} parent=1 // pred_region
      %35 = dma.done [#allocation3], 128
    $region13: #{tpu_custom_call.1} parent=1 // pred_fallthru
      _
    // Predicated region
    $region14: #{tpu_custom_call.1} parent=1 // pred_check
      _
    $region15: #{tpu_custom_call.1} parent=1 // pred_check_branch
      %37 = sbr.rel (0) target = $region17
    $region16: #{tpu_custom_call.1} parent=1 // pred_region
      %39 = dma.done [#allocation6], 128
    $region17: #{tpu_custom_call.1} parent=1 // pred_fallthru
      _
    %v40 = vld [vmem:[#allocation2] sm:$0xff]
    %v41 = vld [vmem:[#allocation5] sm:$0xff]
    %v42 = vsub.f32 0.9, %v40
    %v43 = vmax.f32 %v42, 0.0
    %v44 = vsub.f32 %v40, 0.1
    %v45 = vmax.f32 %v44, 0.0
    %v46 = vmul.f32 %v45, %v45
    %v47 = vmul.f32 %v46, 0.5
    %v48 = vmul.f32 %v43, %v43
    %v49 = vsub.f32 %v48, %v47
    %v50 = vmul.f32 %v41, %v49
    %v51 = vadd.f32 %v47, %v50
    %v52 = vadd.f32 %v51, 0.0
    %53 = vst [vmem:[#allocation7] sm:$0xff] %v52
    // Predicated region
    $region18: #{tpu_custom_call.1} parent=1 // pred_check
      _
    $region19: #{tpu_custom_call.1} parent=1 // pred_check_branch
      %55 = sbr.rel (0) target = $region21
    $region20: #{tpu_custom_call.1} parent=1 // pred_region
      %57 = vsyncadd [#allocation4], 0
      %s59 = sshll.u32 [#allocation7], 4
      %s60 = int_to_ptr.vmem [resolvable:$true] %s59
      %s61 = sshll.u32 %s2, 4
      %s62 = int_to_ptr.hbm [resolvable:$true] %s61
      %64 = dma.vmem_to_hbm [thread:$0]  %s60, 128, %s62, [#allocation4]
    $region21: #{tpu_custom_call.1} parent=1 // pred_fallthru
      _
    // Predicated region
    $region22: #{tpu_custom_call.1} parent=1 // pred_check
      _
    $region23: #{tpu_custom_call.1} parent=1 // pred_check_branch
      %66 = sbr.rel (0) target = $region25
    $region24: #{tpu_custom_call.1} parent=1 // pred_region
      %68 = dma.done [#allocation4], 128
    $region25: #{tpu_custom_call.1} parent=1 // pred_fallthru
      _
    %69 = vsyncpa [#allocation3], 1
    %70 = vsyncpa [#allocation6], 1
    %71 = vsyncpa [#allocation4], 1

</llo_original>
